<compile_context>
chip_gen: v6e
topology: v6e:2x2x1
jax: 0.10.0
libtpu: 0.0.40
codegen_flags: <defaults>
</compile_context>

<pallas_src>
import functools

import jax
import jax.numpy as jnp
from jax.experimental import pallas as pl
from jax.experimental.pallas import tpu as pltpu


def _round_up(x, m):
    return (x + m - 1) // m * m


def _mha_map_kernel(q_ref, wqt_ref, bq_ref, kp_ref, out_ref,
                    *, num_heads, head_dim, hw, hw_pad):
    # q_ref   : (1, TQ, C)        f32 queries
    # wqt_ref : (C, hidden)       bf16, Wq^T with normalize_fact folded in
    # bq_ref  : (1, hidden)       f32,  bq   with normalize_fact folded in
    # kp_ref  : (1, N, Dh, HWpad) bf16, precomputed k projection (zero-padded)
    # out_ref : (1, TQ, N*HWpad)  scores staged here; softmax runs in place
    q = q_ref[0].astype(jnp.bfloat16)                       # (TQ, C)

    if hw_pad != hw:
        # Additive -inf mask for the zero-padded per-head tail: keeps every
        # store full-width / unmasked while padded lanes can never win softmax.
        col = jax.lax.broadcasted_iota(jnp.int32, (1, hw_pad), 1)
        tail = jnp.where(col < hw, 0.0, -1e30).astype(jnp.float32)

    # num_heads is small -> Python-unrolled head loop.  (On v5e, if the score
    # dots ever become the binding unit, batch the heads into one dot_general.)
    for n in range(num_heads):
        lo = n * head_dim
        # Per-head q projection: static slice of the weight *ref* (free) with a
        # full-C contraction on the MXU; bias added in f32.
        qh = (jnp.dot(q, wqt_ref[:, lo:lo + head_dim],
                      preferred_element_type=jnp.float32)
              + bq_ref[:, lo:lo + head_dim])                 # (TQ, Dh) f32
        # Per-head scores, written directly into the lane-aligned output slab
        # (no logits scratch, no concatenates).
        s = jnp.dot(qh.astype(jnp.bfloat16), kp_ref[0, n],
                    preferred_element_type=jnp.float32)      # (TQ, HWpad)
        if hw_pad != hw:
            s = s + tail
        out_ref[0, :, n * hw_pad:(n + 1) * hw_pad] = s.astype(out_ref.dtype)

    # Softmax jointly over (heads x spatial) — matches `flatten(2)` — done in
    # place on the output block, f32 math throughout.  Exact reciprocal so the
    # rows sum to 1 to f32 precision.
    lg = out_ref[0].astype(jnp.float32)                      # (TQ, N*HWpad)
    m = jnp.max(lg, axis=-1, keepdims=True)
    ssum = jnp.sum(jnp.exp(lg - m), axis=-1, keepdims=True)
    inv = 1.0 / ssum                                         # per-row only
    out_ref[0] = (jnp.exp(lg - m) * inv).astype(out_ref.dtype)


def mh_attention_map(q, k_nchw, wq, bq, wk, bk, *, num_heads,
                     q_tile=None, out_dtype=jnp.float32):
    B, Q, C = q.shape
    Bk, Ck, H, W = k_nchw.shape
    assert Bk == B and Ck == C
    HW = H * W
    hidden = wq.shape[0]
    head_dim = hidden // num_heads
    norm_fact = float(hidden / num_heads) ** (-0.5)

    hw_pad = _round_up(HW, 128)          # lane-aligned per-head slab
    P = num_heads * hw_pad               # padded flattened softmax axis

    # ---- one-time wrapper-side preprocessing (tiny XLA ops) -----------------
    # k projection (1x1 conv == channel matmul), computed ONCE per batch here
    # instead of per Q tile inside the kernel.  Shaped per head, zero-padded to
    # a 128-multiple spatial axis, pre-cast to bf16 for the MXU.
    k_flat = k_nchw.astype(jnp.float32).reshape(B, C, HW)
    kp = jnp.einsum('oc,bcs->bos', wk.astype(jnp.float32), k_flat)
    kp = kp + bk.astype(jnp.float32)[None, :, None]          # (B, hidden, HW)
    kp = kp.reshape(B, num_heads, head_dim, HW)
    if hw_pad != HW:
        kp = jnp.pad(kp, ((0, 0), (0, 0), (0, 0), (0, hw_pad - HW)))
    kp = kp.astype(jnp.bfloat16)                              # (B, N, Dh, HWpad)

    # q weights: pre-transpose, fold normalize_fact into weight+bias, pre-cast.
    wq_t = (wq.astype(jnp.float32) * norm_fact).T.astype(jnp.bfloat16)   # (C, hidden)
    bq2 = (bq.astype(jnp.float32) * norm_fact).reshape(1, hidden)        # f32

    # Q tiling: keep 128-row tiles (pad Q; padded rows are sliced off below)
    # rather than collapsing to one huge block when Q % 128 != 0.
    if q_tile is None:
        q_tile = 128
    q_tile = max(8, min(_round_up(q_tile, 8), _round_up(Q, 8)))
    Qp = _round_up(Q, q_tile)
    qf = q.astype(jnp.float32)
    if Qp != Q:
        qf = jnp.pad(qf, ((0, 0), (0, Qp - Q), (0, 0)))

    # ---- explicit VMEM budget (v7x default scoped limit is only 32 MiB) -----
    out_isz = jnp.dtype(out_dtype).itemsize
    block_bytes = (2 * q_tile * C * 4                        # q blocks (double-buffered)
                   + 2 * q_tile * P * out_isz                # out blocks
                   + 2 * num_heads * head_dim * hw_pad * 2   # k-projection blocks (bf16)
                   + C * hidden * 2 + hidden * 4)            # weights / bias
    vmem_limit = int(min(max(3 * block_bytes, 16 * 1024 * 1024),
                         64 * 1024 * 1024))

    kernel = functools.partial(_mha_map_kernel, num_heads=num_heads,
                               head_dim=head_dim, hw=HW, hw_pad=hw_pad)

    out = pl.pallas_call(
        kernel,
        out_shape=jax.ShapeDtypeStruct((B, Qp, P), out_dtype),
        grid=(B, Qp // q_tile),
        in_specs=[
            pl.BlockSpec((1, q_tile, C), lambda b, t: (b, t, 0)),            # q
            pl.BlockSpec((C, hidden), lambda b, t: (0, 0)),                  # Wq^T * norm (bf16)
            pl.BlockSpec((1, hidden), lambda b, t: (0, 0)),                  # bq * norm (f32)
            pl.BlockSpec((1, num_heads, head_dim, hw_pad),
                         lambda b, t: (b, 0, 0, 0)),                         # k-proj (bf16)
        ],
        out_specs=pl.BlockSpec((1, q_tile, P), lambda b, t: (b, t, 0)),
        compiler_params=pltpu.CompilerParams(
            dimension_semantics=("parallel", "parallel"),
            vmem_limit_bytes=vmem_limit),
    )(qf, wq_t, bq2, kp)

    # Drop Q padding and per-head spatial padding; restore (B, Q, N, H, W).
    out = out.reshape(B, Qp, num_heads, hw_pad)
    out = out[:, :Q, :, :HW]
    return out.reshape(B, Q, num_heads, H, W)


def _reference(q, k_nchw, wq, bq, wk, bk, *, num_heads):
    # Pure-JAX f32 reference mirroring the PyTorch forward (mask=None, p=0).
    B, Q, C = q.shape
    _, _, H, W = k_nchw.shape
    hidden = wq.shape[0]
    head_dim = hidden // num_heads
    norm = float(hidden / num_heads) ** (-0.5)
    qp = q @ wq.T + bq                                                 # (B, Q, hidden)
    kp = jnp.einsum('bchw,oc->bohw', k_nchw, wk) + bk[None, :, None, None]
    qh = qp.reshape(B, Q, num_heads, head_dim)
    kh = kp.reshape(B, num_heads, head_dim, H, W)
    w = jnp.einsum('bqnc,bnchw->bqnhw', qh * norm, kh)
    w = jax.nn.softmax(w.reshape(B, Q, -1), axis=-1).reshape(w.shape)
    return w


def _xavier_uniform(key, shape):
    fan_out, fan_in = shape
    limit = (6.0 / (fan_in + fan_out)) ** 0.5
    return jax.random.uniform(key, shape, jnp.float32, -limit, limit)


def _run_case(key, *, B, Q, C, hidden, num_heads, H, W, out_dtype,
              tol_out, tol_sum):
    k_q, k_k, k_wq, k_wk = jax.random.split(key, 4)
    # Deterministic parameter init: xavier-uniform weights, zero biases
    # (matching the module's __init__).
    wq = _xavier_uniform(k_wq, (hidden, C))
    wk = _xavier_uniform(k_wk, (hidden, C))
    bq = jnp.zeros((hidden,), jnp.float32)
    bk = jnp.zeros((hidden,), jnp.float32)
    q = jax.random.normal(k_q, (B, Q, C), jnp.float32)
    k = jax.random.normal(k_k, (B, C, H, W), jnp.float32)

    out = mh_attention_map(q, k, wq, bq, wk, bk, num_heads=num_heads,
                           out_dtype=out_dtype)
    out = jax.block_until_ready(out)
    assert out.shape == (B, Q, num_heads, H, W)

    ref = _reference(q, k, wq, bq, wk, bk, num_heads=num_heads)
    of = out.astype(jnp.float32)
    # bf16 MXU operands: tolerance relaxed vs the pure-f32 reference.
    assert jnp.allclose(of, ref, atol=tol_out, rtol=2e-2), \
        float(jnp.max(jnp.abs(of - ref)))
    # Rows of the joint softmax must sum to ~1 (exact reciprocal in-kernel).
    assert jnp.allclose(of.reshape(B, Q, -1).sum(-1), 1.0, atol=tol_sum)


if __name__ == "__main__":
    root = jax.random.PRNGKey(0)
    key1, key2, key3 = jax.random.split(root, 3)

    # Case 1: lane-aligned spatial map (H*W = 256), f32 output.
    _run_case(key1, B=2, Q=8, C=32, hidden=32, num_heads=2, H=16, W=16,
              out_dtype=jnp.float32, tol_out=2e-3, tol_sum=2e-3)
    # Case 2: ragged Q and H*W (exercises Q padding + per-head 128-lane padding).
    _run_case(key2, B=1, Q=5, C=24, hidden=24, num_heads=3, H=10, W=12,
              out_dtype=jnp.float32, tol_out=2e-3, tol_sum=2e-3)
    # Case 3: bf16 output stream (halves the dominant HBM write), looser checks.
    _run_case(key3, B=2, Q=8, C=32, hidden=32, num_heads=2, H=16, W=16,
              out_dtype=jnp.bfloat16, tol_out=1e-2, tol_sum=1e-2)

    print("KERNEL_OK")
</pallas_src>

<mosaic_0001>
module attributes {stable_mosaic.version = 11 : i64} {
  func.func @_mha_map_kernel(%arg0: i32, %arg1: i32, %arg2: memref<1x8x32xf32, #tpu.memory_space<vmem>>, %arg3: memref<32x32xbf16, #tpu.memory_space<vmem>>, %arg4: memref<1x32xf32, #tpu.memory_space<vmem>>, %arg5: memref<1x2x16x256xbf16, #tpu.memory_space<vmem>>, %arg6: memref<1x8x512xf32, #tpu.memory_space<vmem>>) attributes {dimension_semantics = [#tpu.dimension_semantics<parallel>, #tpu.dimension_semantics<parallel>], iteration_bounds = array<i64: 2, 1>, scalar_prefetch = 0 : i64, scratch_operands = 0 : i64, tpu.core_type = #tpu.core_type<tc>, window_params = [{transform_indices = @transform_0, window_bounds = array<i64: 1, 8, 32>}, {pipeline_mode = #tpu.pipeline_mode<synchronous>, transform_indices = @transform_1, window_bounds = array<i64: 32, 32>}, {pipeline_mode = #tpu.pipeline_mode<synchronous>, transform_indices = @transform_2, window_bounds = array<i64: 1, 32>}, {transform_indices = @transform_3, window_bounds = array<i64: 1, 2, 16, 256>}, {transform_indices = @transform_4, window_bounds = array<i64: 1, 8, 512>}]} {
    %c0 = arith.constant 0 : index
    %c0_0 = arith.constant 0 : index
    %c0_1 = arith.constant 0 : index
    %0 = vector.load %arg2[%c0, %c0_0, %c0_1] : memref<1x8x32xf32, #tpu.memory_space<vmem>>, vector<1x8x32xf32>
    %1 = vector.shape_cast %0 : vector<1x8x32xf32> to vector<8x32xf32>
    %2 = arith.truncf %1 : vector<8x32xf32> to vector<8x32xbf16>
    %c0_2 = arith.constant 0 : index
    %c0_3 = arith.constant 0 : index
    %3 = vector.load %arg3[%c0_2, %c0_3] : memref<32x32xbf16, #tpu.memory_space<vmem>>, vector<32x16xbf16>
    %cst = arith.constant dense<0.000000e+00> : vector<8x16xf32>
    %4 = tpu.matmul %2, %3, %cst {dimension_numbers = #tpu.dot_dimension_numbers<[1], [0], [0], [1], [0, 0, 1, 1], [], []>} : vector<8x32xbf16>, vector<32x16xbf16>, vector<8x16xf32> -> vector<8x16xf32>
    %c0_4 = arith.constant 0 : index
    %c0_5 = arith.constant 0 : index
    %5 = vector.load %arg4[%c0_4, %c0_5] : memref<1x32xf32, #tpu.memory_space<vmem>>, vector<1x16xf32>
    %6 = vector.broadcast %5 : vector<1x16xf32> to vector<8x16xf32>
    %7 = arith.addf %4, %6 : vector<8x16xf32>
    %8 = arith.truncf %7 : vector<8x16xf32> to vector<8x16xbf16>
    %c0_6 = arith.constant 0 : index
    %c0_7 = arith.constant 0 : index
    %c0_8 = arith.constant 0 : index
    %c0_9 = arith.constant 0 : index
    %9 = vector.load %arg5[%c0_6, %c0_7, %c0_8, %c0_9] : memref<1x2x16x256xbf16, #tpu.memory_space<vmem>>, vector<1x1x16x256xbf16>
    %10 = vector.shape_cast %9 : vector<1x1x16x256xbf16> to vector<16x256xbf16>
    %cst_10 = arith.constant dense<0.000000e+00> : vector<8x256xf32>
    %11 = tpu.matmul %8, %10, %cst_10 {dimension_numbers = #tpu.dot_dimension_numbers<[1], [0], [0], [1], [0, 0, 1, 1], [], []>} : vector<8x16xbf16>, vector<16x256xbf16>, vector<8x256xf32> -> vector<8x256xf32>
    %c0_11 = arith.constant 0 : index
    %c0_12 = arith.constant 0 : index
    %c0_13 = arith.constant 0 : index
    %12 = vector.load %arg6[%c0_11, %c0_12, %c0_13] : memref<1x8x512xf32, #tpu.memory_space<vmem>>, vector<1x8x256xf32>
    %13 = vector.shape_cast %12 : vector<1x8x256xf32> to vector<8x256xf32>
    %14 = vector.shape_cast %11 : vector<8x256xf32> to vector<1x8x256xf32>
    tpu.vector_store %arg6[%c0_11, %c0_12, %c0_13], %14 {strides = array<i32>} : memref<1x8x512xf32, #tpu.memory_space<vmem>>, vector<1x8x256xf32>,
    %c0_14 = arith.constant 0 : index
    %c16 = arith.constant 16 : index
    %15 = vector.load %arg3[%c0_14, %c16] : memref<32x32xbf16, #tpu.memory_space<vmem>>, vector<32x16xbf16>
    %cst_15 = arith.constant dense<0.000000e+00> : vector<8x16xf32>
    %16 = tpu.matmul %2, %15, %cst_15 {dimension_numbers = #tpu.dot_dimension_numbers<[1], [0], [0], [1], [0, 0, 1, 1], [], []>} : vector<8x32xbf16>, vector<32x16xbf16>, vector<8x16xf32> -> vector<8x16xf32>
    %c0_16 = arith.constant 0 : index
    %c16_17 = arith.constant 16 : index
    %17 = vector.load %arg4[%c0_16, %c16_17] : memref<1x32xf32, #tpu.memory_space<vmem>>, vector<1x16xf32>
    %18 = vector.broadcast %17 : vector<1x16xf32> to vector<8x16xf32>
    %19 = arith.addf %16, %18 : vector<8x16xf32>
    %20 = arith.truncf %19 : vector<8x16xf32> to vector<8x16xbf16>
    %c0_18 = arith.constant 0 : index
    %c1 = arith.constant 1 : index
    %c0_19 = arith.constant 0 : index
    %c0_20 = arith.constant 0 : index
    %21 = vector.load %arg5[%c0_18, %c1, %c0_19, %c0_20] : memref<1x2x16x256xbf16, #tpu.memory_space<vmem>>, vector<1x1x16x256xbf16>
    %22 = vector.shape_cast %21 : vector<1x1x16x256xbf16> to vector<16x256xbf16>
    %cst_21 = arith.constant dense<0.000000e+00> : vector<8x256xf32>
    %23 = tpu.matmul %20, %22, %cst_21 {dimension_numbers = #tpu.dot_dimension_numbers<[1], [0], [0], [1], [0, 0, 1, 1], [], []>} : vector<8x16xbf16>, vector<16x256xbf16>, vector<8x256xf32> -> vector<8x256xf32>
    %c0_22 = arith.constant 0 : index
    %c0_23 = arith.constant 0 : index
    %c256 = arith.constant 256 : index
    %24 = vector.load %arg6[%c0_22, %c0_23, %c256] : memref<1x8x512xf32, #tpu.memory_space<vmem>>, vector<1x8x256xf32>
    %25 = vector.shape_cast %24 : vector<1x8x256xf32> to vector<8x256xf32>
    %26 = vector.shape_cast %23 : vector<8x256xf32> to vector<1x8x256xf32>
    tpu.vector_store %arg6[%c0_22, %c0_23, %c256], %26 {strides = array<i32>} : memref<1x8x512xf32, #tpu.memory_space<vmem>>, vector<1x8x256xf32>,
    %c0_24 = arith.constant 0 : index
    %c0_25 = arith.constant 0 : index
    %c0_26 = arith.constant 0 : index
    %27 = vector.load %arg6[%c0_24, %c0_25, %c0_26] : memref<1x8x512xf32, #tpu.memory_space<vmem>>, vector<1x8x512xf32>
    %28 = vector.shape_cast %27 : vector<1x8x512xf32> to vector<8x512xf32>
    %cst_27 = arith.constant dense<0xFF800000> : vector<8xf32>
    %29 = vector.multi_reduction <maximumf>, %28, %cst_27 [1] : vector<8x512xf32> to vector<8xf32>
    %30 = vector.shape_cast %29 : vector<8xf32> to vector<8x1xf32>
    %31 = vector.broadcast %30 : vector<8x1xf32> to vector<8x512xf32>
    %32 = arith.subf %28, %31 : vector<8x512xf32>
    %33 = math.exp %32 : vector<8x512xf32>
    %cst_28 = arith.constant dense<0.000000e+00> : vector<8xf32>
    %34 = vector.multi_reduction <add>, %33, %cst_28 [1] : vector<8x512xf32> to vector<8xf32>
    %35 = vector.shape_cast %34 : vector<8xf32> to vector<8x1xf32>
    %cst_29 = arith.constant 1.000000e+00 : f32
    %36 = vector.broadcast %cst_29 : f32 to vector<8x1xf32>
    %37 = arith.divf %36, %35 : vector<8x1xf32>
    %38 = vector.broadcast %30 : vector<8x1xf32> to vector<8x512xf32>
    %39 = arith.subf %28, %38 : vector<8x512xf32>
    %40 = math.exp %39 : vector<8x512xf32>
    %41 = vector.broadcast %37 : vector<8x1xf32> to vector<8x512xf32>
    %42 = arith.mulf %40, %41 : vector<8x512xf32>
    %c0_30 = arith.constant 0 : index
    %c0_31 = arith.constant 0 : index
    %c0_32 = arith.constant 0 : index
    %43 = vector.load %arg6[%c0_30, %c0_31, %c0_32] : memref<1x8x512xf32, #tpu.memory_space<vmem>>, vector<1x8x512xf32>
    %44 = vector.shape_cast %43 : vector<1x8x512xf32> to vector<8x512xf32>
    %45 = vector.shape_cast %42 : vector<8x512xf32> to vector<1x8x512xf32>
    tpu.vector_store %arg6[%c0_30, %c0_31, %c0_32], %45 {strides = array<i32>} : memref<1x8x512xf32, #tpu.memory_space<vmem>>, vector<1x8x512xf32>,
    return
  }
  func.func @transform_0(%arg0: i32, %arg1: i32) -> (i32, i32, i32) {
    %c0_i32 = arith.constant 0 : i32
    %c0_i32_0 = arith.constant 0 : i32
    return %arg0, %arg1, %c0_i32 : i32, i32, i32
  }
  func.func @transform_1(%arg0: i32, %arg1: i32) -> (i32, i32) {
    %c0_i32 = arith.constant 0 : i32
    %c0_i32_0 = arith.constant 0 : i32
    %c0_i32_1 = arith.constant 0 : i32
    return %c0_i32, %c0_i32_0 : i32, i32
  }
  func.func @transform_2(%arg0: i32, %arg1: i32) -> (i32, i32) {
    %c0_i32 = arith.constant 0 : i32
    %c0_i32_0 = arith.constant 0 : i32
    %c0_i32_1 = arith.constant 0 : i32
    return %c0_i32, %c0_i32_0 : i32, i32
  }
  func.func @transform_3(%arg0: i32, %arg1: i32) -> (i32, i32, i32, i32) {
    %c0_i32 = arith.constant 0 : i32
    %c0_i32_0 = arith.constant 0 : i32
    %c0_i32_1 = arith.constant 0 : i32
    %c0_i32_2 = arith.constant 0 : i32
    return %arg0, %c0_i32, %c0_i32_0, %c0_i32_1 : i32, i32, i32, i32
  }
  func.func @transform_4(%arg0: i32, %arg1: i32) -> (i32, i32, i32) {
    %c0_i32 = arith.constant 0 : i32
    %c0_i32_0 = arith.constant 0 : i32
    return %arg0, %arg1, %c0_i32 : i32, i32, i32
  }
}

</mosaic_0001>

<llo_original>
// kernel: tpu_custom_call.1
$region0: #{tpu_custom_call.1}
  #allocation0 [shape = 'u32[]', space=smem, size = 0x4, offset = 0x4, fixed_abs, tag = 'smem constant byte address 0x4 - core index']
  #allocation1 [shape = 'u32[144,128]{1,0:T(1,128)}', space=vmem, size = 0x12000, scoped, tag = 'internal scratch']
  %s0 = inlined_call_operand.hbm [shape: f32[2,8,32], index: 0, kind: input, shape index: {}]
  %s1 = inlined_call_operand.hbm [shape: bf16[32,32], index: 1, kind: input, shape index: {}]
  %s2 = inlined_call_operand.vmem [shape: f32[1,32], index: 2, kind: input, shape index: {}]
  %s3 = inlined_call_operand.hbm [shape: bf16[2,2,16,256], index: 3, kind: input, shape index: {}]
  %s4 = inlined_call_operand.hbm [shape: f32[2,8,512], index: 4, kind: output, shape index: {}]
  %s5 = sld [smem:[#allocation0]]
  $region61: #{tpu_custom_call.1} parent=0
    _
  %s7 = ssub.s32 1, %s5
  %s8 = scalar_select 0, %s7, %s5
  $region1: #{tpu_custom_call.1} parent=0
    #allocation2 [shape = 'u8[8192]{0}', space=vmem, size = 0x2000, scoped, tag = 'input window, operand 0']
    #allocation3 [shape = 's32[2]{0}', space=sflag, size = 0x8, scoped, tag = 'scoped memory for tpu_custom_call.1']
    #allocation4 [shape = 's32[2]{0}', space=sflag, size = 0x8, scoped, tag = 'scoped memory for tpu_custom_call.1']
    #allocation5 [shape = 'u8[8192]{0}', space=vmem, size = 0x2000, scoped, tag = 'input window, operand 1, single buffered']
    #allocation6 [shape = 's32[1]{0}', space=sflag, size = 0x4, scoped, tag = 'scoped memory for tpu_custom_call.1']
    #allocation7 [shape = 'u8[32768]{0}', space=vmem, size = 0x8000, scoped, tag = 'input window, operand 3']
    #allocation8 [shape = 'u8[32768]{0}', space=vmem, size = 0x8000, scoped, tag = 'output window, operand 0']
    %9 = vsyncpa [#allocation3], 0
    %s10 = scalar_lea.sflag [#allocation3], 1
    %11 = vsyncpa %s10, 0
    %12 = vsyncpa [#allocation6], 0
    %13 = vsyncpa [#allocation4], 0
    %s14 = scalar_lea.sflag [#allocation4], 1
    %15 = vsyncpa %s14, 0
    loop: start=0, step=1, limit=4
    $region2: #{tpu_custom_call.1} parent=1 // loop_pre_header
      _
    $region3: #{tpu_custom_call.1} parent=1 // loop_header
      %s17 = sphi 0, %s21
      %p18 = scmp.ge.s32.totalorder %s17, 4
      %s24 = sphi 0, %s36
      %s25 = sphi 0, %s32
      %s26 = sphi 0, %s24
      %s27 = sphi 0, %s25
      %s28 = sphi 0, %s26
      %s29 = sphi 0, %s27
      %s41 = sphi 0, %s43
      %s44 = sphi 0, %s41
      %s45 = sphi 0, %s44
      %s61 = sphi 0, %s45
      %s65 = sphi 0, %s65
      %s67 = sphi 0, %s65
      %s68 = sphi 0, %s67
      %s82 = sphi 0, %s68
      %s86 = sphi 0, %s86
      %s88 = sphi 0, %s86
      %s89 = sphi 0, %s88
      %s103 = sphi 0, %s89
      %s109 = sphi 0, %s111
      %s112 = sphi 0, %s109
      %s113 = sphi 0, %s112
      %s129 = sphi 0, %s113
      %s137 = sphi 0, %s139
      %s140 = sphi 0, %s137
      %s141 = sphi 0, %s140
      %s157 = sphi 0, %s141
    $region4: #{tpu_custom_call.1} parent=1 // loop_header_branch
      %20 = sbr.rel (%p18) target = $region8
    $region5: #{tpu_custom_call.1} parent=1 // loop_body
      %s22 = ssub.s32 %s17, 1
      %s23 = ssub.s32 %s17, 2
      %s30 = sadd.s32 1, %s25
      %p31 = scmp.ge.s32.totalorder %s30, 1
      %s32 = scalar_select %p31, 0, %s30
      %s33 = sadd.s32 1, %s24
      %s34 = scalar_select %p31, %s33, %s24
      %p35 = scmp.ge.s32.totalorder %s34, 2
      %s36 = scalar_select %p35, 0, %s34
      %s37 = ssub.s32 %s24, %s36
      %s38 = ssub.s32 %s25, %s32
      %s39 = sor.u32 %s37, %s38
      %p40 = scmp.eq.s32.totalorder %s39, 0
      %s42 = sadd.s32 %s41, 1
      %s43 = scalar_select %p40, %s41, %s42
      %p46 = pneg %p40
      %p47 = scmp.eq.s32.totalorder %s17, 1
      %p48 = por %p46, %p47
      %p49 = scmp.ne.s32.totalorder %s41, %s44
      %p50 = scmp.eq.s32.totalorder %s17, 0
      %p51 = por %p49, %p50
      %p52 = scmp.ne.s32.totalorder %s41, %s44
      %p53 = scmp.eq.s32.totalorder %s22, 1
      %p54 = por %p52, %p53
      %p55 = scmp.ne.s32.totalorder %s44, %s45
      %p56 = scmp.eq.s32.totalorder %s22, 0
      %p57 = por %p55, %p56
      %p58 = scmp.ne.s32.totalorder %s44, %s45
      %p59 = scmp.eq.s32.totalorder %s23, 1
      %p60 = por %p58, %p59
      %p62 = scmp.ne.s32.totalorder %s45, %s61
      %p63 = scmp.eq.s32.totalorder %s23, 0
      %p64 = por %p62, %p63
      %s66 = sadd.s32 %s65, 1
      %p69 = scmp.eq.s32.totalorder %s17, 1
      %p70 = scmp.ne.s32.totalorder %s65, %s67
      %p71 = scmp.eq.s32.totalorder %s17, 0
      %p72 = por %p70, %p71
      %p73 = scmp.ne.s32.totalorder %s65, %s67
      %p74 = scmp.eq.s32.totalorder %s22, 1
      %p75 = por %p73, %p74
      %p76 = scmp.ne.s32.totalorder %s67, %s68
      %p77 = scmp.eq.s32.totalorder %s22, 0
      %p78 = por %p76, %p77
      %p79 = scmp.ne.s32.totalorder %s67, %s68
      %p80 = scmp.eq.s32.totalorder %s23, 1
      %p81 = por %p79, %p80
      %p83 = scmp.ne.s32.totalorder %s68, %s82
      %p84 = scmp.eq.s32.totalorder %s23, 0
      %p85 = por %p83, %p84
      %s87 = sadd.s32 %s86, 1
      %p90 = scmp.eq.s32.totalorder %s17, 1
      %p91 = scmp.ne.s32.totalorder %s86, %s88
      %p92 = scmp.eq.s32.totalorder %s17, 0
      %p93 = por %p91, %p92
      %p94 = scmp.ne.s32.totalorder %s86, %s88
      %p95 = scmp.eq.s32.totalorder %s22, 1
      %p96 = por %p94, %p95
      %p97 = scmp.ne.s32.totalorder %s88, %s89
      %p98 = scmp.eq.s32.totalorder %s22, 0
      %p99 = por %p97, %p98
      %p100 = scmp.ne.s32.totalorder %s88, %s89
      %p101 = scmp.eq.s32.totalorder %s23, 1
      %p102 = por %p100, %p101
      %p104 = scmp.ne.s32.totalorder %s89, %s103
      %p105 = scmp.eq.s32.totalorder %s23, 0
      %p106 = por %p104, %p105
      %s107 = ssub.s32 %s24, %s36
      %p108 = scmp.eq.s32.totalorder %s107, 0
      %s110 = sadd.s32 %s109, 1
      %s111 = scalar_select %p108, %s109, %s110
      %p114 = pneg %p108
      %p115 = scmp.eq.s32.totalorder %s17, 1
      %p116 = por %p114, %p115
      %p117 = scmp.ne.s32.totalorder %s109, %s112
      %p118 = scmp.eq.s32.totalorder %s17, 0
      %p119 = por %p117, %p118
      %p120 = scmp.ne.s32.totalorder %s109, %s112
      %p121 = scmp.eq.s32.totalorder %s22, 1
      %p122 = por %p120, %p121
      %p123 = scmp.ne.s32.totalorder %s112, %s113
      %p124 = scmp.eq.s32.totalorder %s22, 0
      %p125 = por %p123, %p124
      %p126 = scmp.ne.s32.totalorder %s112, %s113
      %p127 = scmp.eq.s32.totalorder %s23, 1
      %p128 = por %p126, %p127
      %p130 = scmp.ne.s32.totalorder %s113, %s129
      %p131 = scmp.eq.s32.totalorder %s23, 0
      %p132 = por %p130, %p131
      %s133 = ssub.s32 %s24, %s36
      %s134 = ssub.s32 %s25, %s32
      %s135 = sor.u32 %s133, %s134
      %p136 = scmp.eq.s32.totalorder %s135, 0
      %s138 = sadd.s32 %s137, 1
      %s139 = scalar_select %p136, %s137, %s138
      %p142 = pneg %p136
      %p143 = scmp.eq.s32.totalorder %s17, 1
      %p144 = por %p142, %p143
      %p145 = scmp.ne.s32.totalorder %s137, %s140
      %p146 = scmp.eq.s32.totalorder %s17, 0
      %p147 = por %p145, %p146
      %p148 = scmp.ne.s32.totalorder %s137, %s140
      %p149 = scmp.eq.s32.totalorder %s22, 1
      %p150 = por %p148, %p149
      %p151 = scmp.ne.s32.totalorder %s140, %s141
      %p152 = scmp.eq.s32.totalorder %s22, 0
      %p153 = por %p151, %p152
      %p154 = scmp.ne.s32.totalorder %s140, %s141
      %p155 = scmp.eq.s32.totalorder %s23, 1
      %p156 = por %p154, %p155
      %p158 = scmp.ne.s32.totalorder %s141, %s157
      %p159 = scmp.eq.s32.totalorder %s23, 0
      %p160 = por %p158, %p159
      %p161 = scmp.le.s32.totalorder 1, %s17
      %p162 = scmp.lt.s32.totalorder %s17, 3
      %p163 = pnand %p161, %p162
      %p164 = pneg %p163
      // Predicated region
      $region9: #{tpu_custom_call.1} parent=5 // pred_check
        _
      $region10: #{tpu_custom_call.1} parent=5 // pred_check_branch
        %166 = sbr.rel (%p163) target = $region12
      $region11: #{tpu_custom_call.1} parent=5 // pred_region
        %s167 = ssub.s32 %s17, 1
        // Predicated region
        $region13: #{tpu_custom_call.1} parent=11 // pred_check
          %p168 = pneg %p78
        $region14: #{tpu_custom_call.1} parent=11 // pred_check_branch
          %170 = sbr.rel (%p168) target = $region16
        $region15: #{tpu_custom_call.1} parent=11 // pred_region
          %s172 = ssub.s32 256, 256
          %173 = vsyncadd [#allocation6], %s172
          %s174 = sshll.u32 [#allocation5], 4
          %s175 = int_to_ptr.vmem [resolvable:$true] %s174
          %180 = dma.hbm_to_vmem [thread:$0]  %s1, 256, %s175, [#allocation6], 64, 64, 4
        $region16: #{tpu_custom_call.1} parent=11 // pred_fallthru
          _
        // Predicated region
        $region17: #{tpu_custom_call.1} parent=11 // pred_check
          %p181 = pneg %p99
        $region18: #{tpu_custom_call.1} parent=11 // pred_check_branch
          %183 = sbr.rel (%p181) target = $region20
        $region19: #{tpu_custom_call.1} parent=11 // pred_region
          _
        $region20: #{tpu_custom_call.1} parent=11 // pred_fallthru
          _
      $region12: #{tpu_custom_call.1} parent=5 // pred_fallthru
        _
      %p184 = scmp.lt.s32.totalorder %s17, 2
      // Predicated region
      $region21: #{tpu_custom_call.1} parent=5 // pred_check
        %p185 = pneg %p184
      $region22: #{tpu_custom_call.1} parent=5 // pred_check_branch
        %187 = sbr.rel (%p185) target = $region24
      $region23: #{tpu_custom_call.1} parent=5 // pred_region
        // Predicated region
        $region25: #{tpu_custom_call.1} parent=23 // pred_check
          %p188 = pneg %p51
        $region26: #{tpu_custom_call.1} parent=23 // pred_check_branch
          %190 = sbr.rel (%p188) target = $region28
        $region27: #{tpu_custom_call.1} parent=23 // pred_region
          %s191 = sand.u32 %s17, 1
          %s192 = scalar_lea.sflag [#allocation3], %s191
          %s193 = sand.u32 %s41, 1
          %s194 = smul.addr %s193, 8
          %s195 = scalar_lea.vmem [#allocation2], %s194
          %s197 = ssub.s32 128, 128
          %198 = vsyncadd %s192, %s197
          %s199 = sadd.s32 %s25, %s24
          %s200 = smul.addr %s199, 128
          %s201 = scalar_lea.hbm %s0, %s200
          %s203 = sshll.u32 %s195, 4
          %s204 = int_to_ptr.vmem [resolvable:$true] %s203
          %206 = dma.hbm_to_vmem [thread:$0]  %s201, 128, %s204, %s192
        $region28: #{tpu_custom_call.1} parent=23 // pred_fallthru
          _
        // Predicated region
        $region29: #{tpu_custom_call.1} parent=23 // pred_check
          %p207 = pneg %p119
        $region30: #{tpu_custom_call.1} parent=23 // pred_check_branch
          %209 = sbr.rel (%p207) target = $region32
        $region31: #{tpu_custom_call.1} parent=23 // pred_region
          %s210 = sand.u32 %s17, 1
          %s211 = scalar_lea.sflag [#allocation3], %s210
          %s212 = sand.u32 %s109, 1
          %s213 = smul.addr %s212, 32
          %s214 = scalar_lea.vmem [#allocation7], %s213
          %s216 = ssub.s32 512, 512
          %217 = vsyncadd %s211, %s216
          %s218 = smul.addr %s24, 8
          %s219 = smul.addr %s218, 64
          %s220 = scalar_lea.hbm %s3, %s219
          %s221 = sshll.u32 %s214, 4
          %s222 = int_to_ptr.vmem [resolvable:$true] %s221
          %227 = dma.hbm_to_vmem [thread:$0]  %s220, 512, %s222, %s211, 128, 128, 8
        $region32: #{tpu_custom_call.1} parent=23 // pred_fallthru
          _
      $region24: #{tpu_custom_call.1} parent=5 // pred_fallthru
        _
      %p228 = scmp.le.s32.totalorder 1, %s17
      %p229 = scmp.lt.s32.totalorder %s17, 3
      %p230 = pnand %p228, %p229
      %p231 = pneg %p230
      // Predicated region
      $region33: #{tpu_custom_call.1} parent=5 // pred_check
        _
      $region34: #{tpu_custom_call.1} parent=5 // pred_check_branch
        %233 = sbr.rel (%p230) target = $region36
      $region35: #{tpu_custom_call.1} parent=5 // pred_region
        %s234 = ssub.s32 %s17, 1
        %s235 = sand.u32 %s22, 1
        %s236 = scalar_lea.sflag [#allocation3], %s235
        %s237 = sand.u32 %s44, 1
        %s238 = smul.addr %s237, 8
        %s239 = scalar_lea.vmem [#allocation2], %s238
        // Predicated region
        $region37: #{tpu_custom_call.1} parent=35 // pred_check
          %p240 = pneg %p57
        $region38: #{tpu_custom_call.1} parent=35 // pred_check_branch
          %242 = sbr.rel (%p240) target = $region40
        $region39: #{tpu_custom_call.1} parent=35 // pred_region
          %243 = dma.done %s236, 128
        $region40: #{tpu_custom_call.1} parent=35 // pred_fallthru
          _
        // Predicated region
        $region41: #{tpu_custom_call.1} parent=35 // pred_check
          %p244 = pneg %p78
        $region42: #{tpu_custom_call.1} parent=35 // pred_check_branch
          %246 = sbr.rel (%p244) target = $region44
        $region43: #{tpu_custom_call.1} parent=35 // pred_region
          %247 = dma.done [#allocation6], 256
        $region44: #{tpu_custom_call.1} parent=35 // pred_fallthru
          _
        %s248 = sand.u32 %s22, 1
        %s249 = scalar_lea.sflag [#allocation3], %s248
        %s250 = sand.u32 %s112, 1
        %s251 = smul.addr %s250, 32
        %s252 = scalar_lea.vmem [#allocation7], %s251
        // Predicated region
        $region45: #{tpu_custom_call.1} parent=35 // pred_check
          %p253 = pneg %p125
        $region46: #{tpu_custom_call.1} parent=35 // pred_check_branch
          %255 = sbr.rel (%p253) target = $region48
        $region47: #{tpu_custom_call.1} parent=35 // pred_region
          %256 = dma.done %s249, 512
        $region48: #{tpu_custom_call.1} parent=35 // pred_fallthru
          _
        %s257 = sand.u32 %s22, 1
        %s258 = scalar_lea.sflag [#allocation3], %s257
        %s259 = sand.u32 %s44, 1
        %s260 = smul.addr %s259, 8
        %s261 = scalar_lea.vmem [#allocation2], %s260
        %p262 = pneg %p57
        %p263 = pneg %p54
        %p264 = pneg %p78
        %p265 = pneg %p75
        %p266 = pneg %p99
        %p267 = pneg %p96
        %s268 = sand.u32 %s22, 1
        %s269 = scalar_lea.sflag [#allocation3], %s268
        %s270 = sand.u32 %s112, 1
        %s271 = smul.addr %s270, 32
        %s272 = scalar_lea.vmem [#allocation7], %s271
        %p273 = pneg %p125
        %p274 = pneg %p122
        %p275 = pneg %p153
        %p276 = pneg %p150
        %s277 = sand.u32 %s140, 1
        %s278 = scalar_lea.sflag [#allocation4], %s277
        %s279 = sand.u32 %s140, 1
        %s280 = smul.addr %s279, 32
        %s281 = scalar_lea.vmem [#allocation8], %s280
        %v283 = vld [vmem:[%s239] sm:$0xff]
        %v284 = vpack.c.bf16 %v283, %v283
        %v285 = vld [vmem:[#allocation5] sm:$0xf]
        %v286 = vld [vmem:[#allocation5 + $0x4] sm:$0xf]
        %v287 = vld [vmem:[#allocation5 + $0x8] sm:$0xf]
        %v288 = vld [vmem:[#allocation5 + $0xc] sm:$0xf]
        %v289 = vld [vmem:[%s2] sm:$0x1]
        %v291 = vlaneseq
        %v292 = vshrl.u32 %v291, 7
        %v293 = vsub.s32 0, %v292
        %v294 = vrot.slane %v289, %v293
        %v300 = vunpack.c.l.b16 %v285
        %v301 = vunpack.c.l.b16 %v286
        %v302 = vunpack.c.l.b16 %v287
        %v303 = vunpack.c.l.b16 %v288
        %v304 = vpack.c.b16 %v301, %v300
        %v305 = vpack.c.b16 %v303, %v302
        %vm308 = vcmask 261120
        %v310 = vsel %vm308, %v284, 0
        %312 = vmatprep.subr.bf16.mxu0 0
        %313 = vmatpush1.bf16.msra.mxu0 0
        %314 = vmatprep.subr.bf16.mxu0 0
        %315 = vmatpush1.bf16.msra.mxu0 0
        %316 = vmatprep.subr.bf16.mxu0 0
        %317 = vmatpush1.bf16.msra.mxu0 0
        %318 = vmatprep.subr.bf16.mxu0 0
        %319 = vmatpush1.bf16.msra.mxu0 0
        %320 = vmatprep.subr.bf16.mxu0 0
        %321 = vmatpush1.bf16.msra.mxu0 0
        %322 = vmatprep.subr.bf16.mxu0 0
        %323 = vmatpush1.bf16.msra.mxu0 0
        %324 = vmatprep.subr.bf16.mxu0 0
        %325 = vmatpush1.bf16.msra.mxu0 %v305
        %326 = vmatprep.subr.bf16.mxu0 0
        %327 = vmatpush1.bf16.msra.mxu0 %v304
        %328 = vmatprep.subr.bf16.mxu0 0
        %329 = vmatpush2.bf16.msra.mxu0 0
        %330 = vmatprep.subr.bf16.mxu0 0
        %331 = vmatpush2.bf16.msra.mxu0 0
        %332 = vmatprep.subr.bf16.mxu0 0
        %333 = vmatpush2.bf16.msra.mxu0 0
        %334 = vmatprep.subr.bf16.mxu0 0
        %335 = vmatpush2.bf16.msra.mxu0 0
        %336 = vmatprep.subr.bf16.mxu0 0
        %337 = vmatpush2.bf16.msra.mxu0 0
        %338 = vmatprep.subr.bf16.mxu0 0
        %339 = vmatpush2.bf16.msra.mxu0 0
        %340 = vmatprep.subr.bf16.mxu0 0
        %341 = vmatpush2.bf16.msra.mxu0 0
        %342 = vmatprep.subr.bf16.mxu0 0
        %343 = vmatpush2.bf16.msra.mxu0 0
        %344 = vmatprep.mubr.bf16.mxu0 0
        %345 = vmatmul.mubr.bf16.gmra.mxu0 %v310
        %v346 = vpop.f32.mrf.mxu0
        %v347 = vadd.f32 %v294, %v346
        %v348 = vpop.f32.mrf.mxu0
        %v349 = vpop.f32.mrf.mxu0
        %v350 = vpop.f32.mrf.mxu0
        %351 = vdwg.mxu0
        %v352 = vpack.c.bf16 %v347, %v347
        %v353 = vld [vmem:[%s252] sm:$0xff]
        %v354 = vld [vmem:[%s252 + $0x8] sm:$0xff]
        %v357 = vunpack.c.l.b16 %v353
        %v358 = vunpack.c.h.b16 %v353
        %v359 = vunpack.c.l.b16 %v354
        %v360 = vunpack.c.h.b16 %v354
        %v361 = vpack.c.b16 %v359, %v357
        %v362 = vpack.c.b16 %v360, %v358
        %vm365 = vcmask 130048
        %v367 = vsel %vm365, %v352, 0
        %369 = vmatprep.subr.bf16.mxu0 0
        %370 = vmatpush1.bf16.msra.mxu0 0
        %371 = vmatprep.subr.bf16.mxu0 0
        %372 = vmatpush1.bf16.msra.mxu0 0
        %373 = vmatprep.subr.bf16.mxu0 0
        %374 = vmatpush1.bf16.msra.mxu0 0
        %375 = vmatprep.subr.bf16.mxu0 0
        %376 = vmatpush1.bf16.msra.mxu0 0
        %377 = vmatprep.subr.bf16.mxu0 0
        %378 = vmatpush1.bf16.msra.mxu0 0
        %379 = vmatprep.subr.bf16.mxu0 0
        %380 = vmatpush1.bf16.msra.mxu0 0
        %381 = vmatprep.subr.bf16.mxu0 0
        %382 = vmatpush1.bf16.msra.mxu0 0
        %383 = vmatprep.subr.bf16.mxu0 %v362
        %384 = vmatpush1.bf16.msra.mxu0 %v361
        %385 = vmatprep.subr.bf16.mxu0 0
        %386 = vmatpush2.bf16.msra.mxu0 0
        %387 = vmatprep.subr.bf16.mxu0 0
        %388 = vmatpush2.bf16.msra.mxu0 0
        %389 = vmatprep.subr.bf16.mxu0 0
        %390 = vmatpush2.bf16.msra.mxu0 0
        %391 = vmatprep.subr.bf16.mxu0 0
        %392 = vmatpush2.bf16.msra.mxu0 0
        %393 = vmatprep.subr.bf16.mxu0 0
        %394 = vmatpush2.bf16.msra.mxu0 0
        %395 = vmatprep.subr.bf16.mxu0 0
        %396 = vmatpush2.bf16.msra.mxu0 0
        %397 = vmatprep.subr.bf16.mxu0 0
        %398 = vmatpush2.bf16.msra.mxu0 0
        %399 = vmatprep.subr.bf16.mxu0 0
        %400 = vmatpush2.bf16.msra.mxu0 0
        %401 = vmatprep.mubr.bf16.mxu0 0
        %402 = vmatmul.mubr.bf16.gmra.mxu0 %v367
        %v403 = vpop.f32.mrf.mxu0
        %v404 = vadd.f32 0.0, %v403
        %v405 = vpop.f32.mrf.mxu0
        %v406 = vadd.f32 0.0, %v405
        %v407 = vpop.f32.mrf.mxu0
        %v408 = vpop.f32.mrf.mxu0
        %409 = vdwg.mxu0
        %410 = vst [vmem:[%s281] sm:$0xff] %v404
        %411 = vst [vmem:[%s281 + $0x8] sm:$0xff] %v406
        %v412 = vld [vmem:[#allocation5] sm:$0xf]
        %v413 = vld [vmem:[#allocation5 + $0x4] sm:$0xf]
        %v414 = vld [vmem:[#allocation5 + $0x8] sm:$0xf]
        %v415 = vld [vmem:[#allocation5 + $0xc] sm:$0xf]
        %v416 = vld [vmem:[%s2] sm:$0x1]
        %v418 = vlaneseq
        %v419 = vshrl.u32 %v418, 7
        %v420 = vsub.s32 0, %v419
        %v421 = vrot.slane %v416, %v420
        %v426 = vunpack.c.l.b16 %v412
        %v427 = vunpack.c.l.b16 %v413
        %v428 = vunpack.c.l.b16 %v414
        %v429 = vunpack.c.l.b16 %v415
        %v430 = vpack.c.b16 %v427, %v426
        %v431 = vpack.c.b16 %v429, %v428
        %432 = vrot.lane.b32.xlu0 %v430, 112
        %v433 = vpop.permute.xlu0 %432
        %434 = vrot.lane.b32.xlu0 %v431, 112
        %v435 = vpop.permute.xlu0 %434
        %438 = vrot.lane.b32.xlu0 %v421, 112
        %v439 = vpop.permute.xlu0 %438
        %441 = vmatprep.subr.bf16.mxu0 0
        %442 = vmatpush1.bf16.msra.mxu0 0
        %443 = vmatprep.subr.bf16.mxu0 0
        %444 = vmatpush1.bf16.msra.mxu0 0
        %445 = vmatprep.subr.bf16.mxu0 0
        %446 = vmatpush1.bf16.msra.mxu0 0
        %447 = vmatprep.subr.bf16.mxu0 0
        %448 = vmatpush1.bf16.msra.mxu0 0
        %449 = vmatprep.subr.bf16.mxu0 0
        %450 = vmatpush1.bf16.msra.mxu0 0
        %451 = vmatprep.subr.bf16.mxu0 0
        %452 = vmatpush1.bf16.msra.mxu0 0
        %453 = vmatprep.subr.bf16.mxu0 0
        %454 = vmatpush1.bf16.msra.mxu0 %v435
        %455 = vmatprep.subr.bf16.mxu0 0
        %456 = vmatpush1.bf16.msra.mxu0 %v433
        %457 = vmatprep.subr.bf16.mxu0 0
        %458 = vmatpush2.bf16.msra.mxu0 0
        %459 = vmatprep.subr.bf16.mxu0 0
        %460 = vmatpush2.bf16.msra.mxu0 0
        %461 = vmatprep.subr.bf16.mxu0 0
        %462 = vmatpush2.bf16.msra.mxu0 0
        %463 = vmatprep.subr.bf16.mxu0 0
        %464 = vmatpush2.bf16.msra.mxu0 0
        %465 = vmatprep.subr.bf16.mxu0 0
        %466 = vmatpush2.bf16.msra.mxu0 0
        %467 = vmatprep.subr.bf16.mxu0 0
        %468 = vmatpush2.bf16.msra.mxu0 0
        %469 = vmatprep.subr.bf16.mxu0 0
        %470 = vmatpush2.bf16.msra.mxu0 0
        %471 = vmatprep.subr.bf16.mxu0 0
        %472 = vmatpush2.bf16.msra.mxu0 0
        %473 = vmatprep.mubr.bf16.mxu0 0
        %474 = vmatmul.mubr.bf16.gmra.mxu0 %v310
        %v475 = vpop.f32.mrf.mxu0
        %v476 = vadd.f32 %v439, %v475
        %v477 = vpop.f32.mrf.mxu0
        %v478 = vpop.f32.mrf.mxu0
        %v479 = vpop.f32.mrf.mxu0
        %480 = vdwg.mxu0
        %v481 = vpack.c.bf16 %v476, %v476
        %s482 = scalar_lea.vmem %s252, 16 [#allocation7]
        %v483 = vld [vmem:[%s482] sm:$0xff]
        %v484 = vld [vmem:[%s482 + $0x8] sm:$0xff]
        %v487 = vunpack.c.l.b16 %v483
        %v488 = vunpack.c.h.b16 %v483
        %v489 = vunpack.c.l.b16 %v484
        %v490 = vunpack.c.h.b16 %v484
        %v491 = vpack.c.b16 %v489, %v487
        %v492 = vpack.c.b16 %v490, %v488
        %v496 = vsel %vm365, %v481, 0
        %498 = vmatprep.subr.bf16.mxu0 0
        %499 = vmatpush1.bf16.msra.mxu0 0
        %500 = vmatprep.subr.bf16.mxu0 0
        %501 = vmatpush1.bf16.msra.mxu0 0
        %502 = vmatprep.subr.bf16.mxu0 0
        %503 = vmatpush1.bf16.msra.mxu0 0
        %504 = vmatprep.subr.bf16.mxu0 0
        %505 = vmatpush1.bf16.msra.mxu0 0
        %506 = vmatprep.subr.bf16.mxu0 0
        %507 = vmatpush1.bf16.msra.mxu0 0
        %508 = vmatprep.subr.bf16.mxu0 0
        %509 = vmatpush1.bf16.msra.mxu0 0
        %510 = vmatprep.subr.bf16.mxu0 0
        %511 = vmatpush1.bf16.msra.mxu0 0
        %512 = vmatprep.subr.bf16.mxu0 %v492
        %513 = vmatpush1.bf16.msra.mxu0 %v491
        %514 = vmatprep.subr.bf16.mxu0 0
        %515 = vmatpush2.bf16.msra.mxu0 0
        %516 = vmatprep.subr.bf16.mxu0 0
        %517 = vmatpush2.bf16.msra.mxu0 0
        %518 = vmatprep.subr.bf16.mxu0 0
        %519 = vmatpush2.bf16.msra.mxu0 0
        %520 = vmatprep.subr.bf16.mxu0 0
        %521 = vmatpush2.bf16.msra.mxu0 0
        %522 = vmatprep.subr.bf16.mxu0 0
        %523 = vmatpush2.bf16.msra.mxu0 0
        %524 = vmatprep.subr.bf16.mxu0 0
        %525 = vmatpush2.bf16.msra.mxu0 0
        %526 = vmatprep.subr.bf16.mxu0 0
        %527 = vmatpush2.bf16.msra.mxu0 0
        %528 = vmatprep.subr.bf16.mxu0 0
        %529 = vmatpush2.bf16.msra.mxu0 0
        %530 = vmatprep.mubr.bf16.mxu0 0
        %531 = vmatmul.mubr.bf16.gmra.mxu0 %v496
        %v532 = vpop.f32.mrf.mxu0
        %v533 = vadd.f32 0.0, %v532
        %v534 = vpop.f32.mrf.mxu0
        %v535 = vadd.f32 0.0, %v534
        %v536 = vpop.f32.mrf.mxu0
        %v537 = vpop.f32.mrf.mxu0
        %538 = vdwg.mxu0
        %539 = vst [vmem:[%s281 + $0x10] sm:$0xff] %v533
        %540 = vst [vmem:[%s281 + $0x18] sm:$0xff] %v535
        %v541 = vld [vmem:[%s281] sm:$0xff]
        %v542 = vld [vmem:[%s281 + $0x8] sm:$0xff]
        %v543 = vld [vmem:[%s281 + $0x10] sm:$0xff]
        %v544 = vld [vmem:[%s281 + $0x18] sm:$0xff]
        %v545 = vmax.f32 %v541, %v542
        %v546 = vmax.f32 %v543, %v544
        %v547 = vmax.f32 %v545, %v546
        %548 = vmax.xlane.f32.xlu0 %v547
        %v549 = vpop.xlane.xlu0 %548
        %v550 = vsub.f32 %v541, %v549
        %v551 = vsub.f32 %v542, %v549
        %v552 = vsub.f32 %v543, %v549
        %v553 = vsub.f32 %v544, %v549
        %v554 = vmul.f32 %v550, 1.442695
        %v555 = vpow.pop %v554
        %v556 = vmul.f32 %v551, 1.442695
        %v557 = vpow.pop %v556
        %v558 = vmul.f32 %v552, 1.442695
        %v559 = vpow.pop %v558
        %v560 = vmul.f32 %v553, 1.442695
        %v561 = vpow.pop %v560
        %v562 = vadd.f32 %v555, %v557
        %v563 = vadd.f32 %v562, %v559
        %v564 = vadd.f32 %v563, %v561
        %565 = vadd.xlane.f32.xlu0 %v564
        %v566 = vpop.xlane.xlu0 %565
        %v567 = vrcp.pop %v566
        %v568 = vmul.f32 1.0, %v567
        %v569 = vmul.f32 %v555, %v568
        %v570 = vmul.f32 %v557, %v568
        %v571 = vmul.f32 %v559, %v568
        %v572 = vmul.f32 %v561, %v568
        %573 = vst [vmem:[%s281] sm:$0xff] %v569
        %574 = vst [vmem:[%s281 + $0x8] sm:$0xff] %v570
        %575 = vst [vmem:[%s281 + $0x10] sm:$0xff] %v571
        %576 = vst [vmem:[%s281 + $0x18] sm:$0xff] %v572
        %s577 = sand.u32 %s140, 1
        %s578 = scalar_lea.sflag [#allocation4], %s577
        %s579 = sand.u32 %s140, 1
        %s580 = smul.addr %s579, 32
        %s581 = scalar_lea.vmem [#allocation8], %s580
        // Predicated region
        $region49: #{tpu_custom_call.1} parent=35 // pred_check
          %p582 = pneg %p150
        $region50: #{tpu_custom_call.1} parent=35 // pred_check_branch
          %584 = sbr.rel (%p582) target = $region52
        $region51: #{tpu_custom_call.1} parent=35 // pred_region
          %s586 = ssub.s32 512, 512
          %587 = vsyncadd %s578, %s586
          %s588 = smul.addr %s27, 4
          %s589 = smul.addr %s26, 4
          %s590 = sadd.s32 %s588, %s589
          %s591 = smul.addr %s590, 128
          %s592 = scalar_lea.hbm %s4, %s591
          %s594 = sshll.u32 %s581, 4
          %s595 = int_to_ptr.vmem [resolvable:$true] %s594
          %597 = dma.vmem_to_hbm [thread:$0]  %s595, 512, %s592, %s578
        $region52: #{tpu_custom_call.1} parent=35 // pred_fallthru
          _
      $region36: #{tpu_custom_call.1} parent=5 // pred_fallthru
        _
      %p598 = scmp.le.s32.totalorder 2, %s17
      // Predicated region
      $region53: #{tpu_custom_call.1} parent=5 // pred_check
        %p599 = pneg %p598
      $region54: #{tpu_custom_call.1} parent=5 // pred_check_branch
        %601 = sbr.rel (%p599) target = $region56
      $region55: #{tpu_custom_call.1} parent=5 // pred_region
        %s602 = ssub.s32 %s17, 2
        // Predicated region
        $region57: #{tpu_custom_call.1} parent=55 // pred_check
          %p603 = pneg %p156
        $region58: #{tpu_custom_call.1} parent=55 // pred_check_branch
          %605 = sbr.rel (%p603) target = $region60
        $region59: #{tpu_custom_call.1} parent=55 // pred_region
          %s606 = sand.u32 %s141, 1
          %s607 = scalar_lea.sflag [#allocation4], %s606
          %s608 = sand.u32 %s141, 1
          %s609 = smul.addr %s608, 32
          %s610 = scalar_lea.vmem [#allocation8], %s609
          %611 = dma.done %s607, 512
        $region60: #{tpu_custom_call.1} parent=55 // pred_fallthru
          _
      $region56: #{tpu_custom_call.1} parent=5 // pred_fallthru
        _
    $region6: #{tpu_custom_call.1} parent=1 // loop_footer
      %s21 = sadd.s32 1, %s17
    $region7: #{tpu_custom_call.1} parent=1 // loop_footer_branch
      %16 = sbr.rel target = $region3
    $region8: #{tpu_custom_call.1} parent=1 // loop_exit
      _
    %612 = vsyncpa [#allocation3], 1
    %s613 = scalar_lea.sflag [#allocation3], 1
    %614 = vsyncpa %s613, 1
    %615 = vsyncpa [#allocation6], 1
    %616 = vsyncpa [#allocation4], 1
    %s617 = scalar_lea.sflag [#allocation4], 1
    %618 = vsyncpa %s617, 1

</llo_original>
